<compile_context>
chip_gen: v7x
topology: tpu7x:2x2x1
jax: 0.10.0
libtpu: 0.0.40
codegen_flags: <defaults>
</compile_context>

<pallas_src>
import jax
import jax.numpy as jnp
from jax.experimental import pallas as pl
from jax.experimental.pallas import tpu as pltpu

_SHIFT_LIST = [
    12.615314483642578, 0.0, -0.00042932009091600776, 10.0, 3.0, 2.0,
    4.006599192507565e-05, -0.4567539691925049, -0.019999638199806213,
    -19.99979019165039, -149.963134765625, 0.004197417292743921,
    -0.0004279722925275564,
]

_SCALE_LIST = [
    155663427.38468552, 25787.57421875, 0.000783147057518363, 2.0, 20.0, 40.0,
    1.9999514701485168, 1.02848482131958, 0.03999875485897064,
    39.99972915649414, 299.958740234375, 1301.8299090280198,
    0.0007813300180714577,
]

NUM_FEATURES = 13           # F
_LANES = 128                # vreg lane width
_ROW_ALIGN = NUM_FEATURES * 8   # 104: multiple of 13 (pattern period) and 8 (sublanes)
_TILE_ROWS = _ROW_ALIGN * 40    # 4160 rows -> ~2.08 MiB per f32 (rows, 128) block
# Below this element count (~1 MiB of read+write traffic) a fused XLA
# elementwise op beats a standalone pallas_call.
_MIN_PALLAS_ELEMS = 128 * 1024


def _round_up(n: int, m: int) -> int:
    return ((n + m - 1) // m) * m


def _xla_normalize(x: jax.Array) -> jax.Array:
    """Plain-XLA fallback for tiny inputs and the unaligned tail."""
    shift = jnp.array(_SHIFT_LIST, dtype=jnp.float32)
    inv_scale = 1.0 / jnp.array(_SCALE_LIST, dtype=jnp.float32)
    return ((x - shift[None, :]) * inv_scale[None, :]).astype(x.dtype)


def _norm_kernel(x_ref, shift_ref, inv_scale_ref, o_ref):
    # Pure elementwise hot path on lane-dense blocks: subtract + multiply (VPU).
    o_ref[...] = ((x_ref[...] - shift_ref[...]) * inv_scale_ref[...]).astype(o_ref.dtype)


@jax.jit
def _normalize_aligned(x: jax.Array) -> jax.Array:
    """Lane-dense Pallas path.  x: (B, 13) float32 with B % 128 == 0."""
    b, f = x.shape
    n_rows = (b * f) // _LANES          # multiple of 13 since b % 128 == 0

    # Row tile: multiple of 104 so every block start is aligned with the
    # 13-row (1664-element) repeating feature pattern and the 8-sublane
    # granule.  Clamp so the grid has >= 2 steps when possible ("parallel"
    # then shards across both v7x TensorCores; neutral on v5e/v6e).
    tile_rows = min(
        _TILE_ROWS,
        max(_ROW_ALIGN, _round_up(pl.cdiv(n_rows, 2), _ROW_ALIGN)),
    )
    grid = (pl.cdiv(n_rows, tile_rows),)

    # Free row-major reshape of the same HBM buffer: (B, 13) -> (n_rows, 128).
    x_flat = x.reshape(n_rows, _LANES)

    # Pre-tiled broadcast constants: element (r, c) of any block has feature
    # index (r*128 + c) % 13 because every block starts at a multiple of 13
    # rows.  Built at trace time; constant-folded under jit.
    shift = jnp.array(_SHIFT_LIST, dtype=jnp.float32)
    inv_scale = 1.0 / jnp.array(_SCALE_LIST, dtype=jnp.float32)
    feat = jnp.arange(tile_rows * _LANES, dtype=jnp.int32) % f
    shift_blk = shift[feat].reshape(tile_rows, _LANES)
    inv_scale_blk = inv_scale[feat].reshape(tile_rows, _LANES)

    n_elems = b * f
    out_flat = pl.pallas_call(
        _norm_kernel,
        out_shape=jax.ShapeDtypeStruct((n_rows, _LANES), x.dtype),
        grid_spec=pltpu.PrefetchScalarGridSpec(
            num_scalar_prefetch=0,
            grid=grid,
            in_specs=[
                pl.BlockSpec((tile_rows, _LANES), lambda i: (i, 0)),
                # Constant block index -> fetched once, stays VMEM-resident.
                pl.BlockSpec((tile_rows, _LANES), lambda i: (0, 0)),
                pl.BlockSpec((tile_rows, _LANES), lambda i: (0, 0)),
            ],
            out_specs=pl.BlockSpec((tile_rows, _LANES), lambda i: (i, 0)),
        ),
        compiler_params=pltpu.CompilerParams(
            dimension_semantics=("parallel",),
            vmem_limit_bytes=32 << 20,
        ),
        cost_estimate=pl.CostEstimate(
            flops=2 * n_elems, transcendentals=0, bytes_accessed=8 * n_elems
        ),
    )(x_flat, shift_blk, inv_scale_blk)

    return out_flat.reshape(b, f)


def normalization_layer(x: jax.Array, matching: bool = True) -> jax.Array:
    """Pallas equivalent of NormalizationLayer.forward (functional, not in-place)."""
    if not matching:
        return x

    b, f = x.shape
    assert f == NUM_FEATURES, f"expected {NUM_FEATURES} features, got {f}"
    assert x.dtype == jnp.float32, "NormalizationLayer operates on float32"

    # Tiny / mid-size inputs: let XLA fuse the elementwise op.
    if b * f < _MIN_PALLAS_ELEMS:
        return _xla_normalize(x)

    b_main = (b // _LANES) * _LANES
    if b_main == 0:
        return _xla_normalize(x)
    if b_main == b:
        return _normalize_aligned(x)

    # TODO(synk): the <128-row tail uses the XLA path plus one concat copy;
    # a padded final Pallas block would avoid the extra copy.
    main = _normalize_aligned(x[:b_main])
    tail = _xla_normalize(x[b_main:])
    return jnp.concatenate([main, tail], axis=0)


if __name__ == "__main__":
    key = jax.random.PRNGKey(0)
    batch, features = 16384, 13   # 128-aligned batch -> lane-dense Pallas path
    x = jax.random.normal(key, (batch, features), dtype=jnp.float32) * 10.0

    out = normalization_layer(x, matching=True)
    jax.block_until_ready(out)

    shift = jnp.array(_SHIFT_LIST, dtype=jnp.float32)
    scale = jnp.array(_SCALE_LIST, dtype=jnp.float32)
    ref = (x - shift[None, :]) / scale[None, :]
    assert out.shape == x.shape and out.dtype == x.dtype
    assert jnp.allclose(out, ref, rtol=1e-5, atol=1e-6), float(
        jnp.max(jnp.abs(out - ref))
    )

    # Unaligned batch: Pallas on the 128-aligned prefix, XLA on the tail.
    x2 = jax.random.normal(jax.random.PRNGKey(1), (batch + 77, features),
                           dtype=jnp.float32) * 10.0
    out2 = normalization_layer(x2, matching=True)
    jax.block_until_ready(out2)
    ref2 = (x2 - shift[None, :]) / scale[None, :]
    assert jnp.allclose(out2, ref2, rtol=1e-5, atol=1e-6)

    # matching=False path is identity.
    out_id = normalization_layer(x, matching=False)
    assert out_id is x

    print("KERNEL_OK")
</pallas_src>

<mosaic_0001>
module attributes {stable_mosaic.version = 11 : i64} {
  func.func @_norm_kernel(%arg0: i32, %arg1: memref<832x128xf32, #tpu.memory_space<vmem>>, %arg2: memref<832x128xf32, #tpu.memory_space<vmem>>, %arg3: memref<832x128xf32, #tpu.memory_space<vmem>>, %arg4: memref<832x128xf32, #tpu.memory_space<vmem>>) attributes {dimension_semantics = [#tpu.dimension_semantics<parallel>], iteration_bounds = array<i64: 2>, scalar_prefetch = 0 : i64, scratch_operands = 0 : i64, tpu.core_type = #tpu.core_type<tc>, window_params = [{transform_indices = @transform_0, window_bounds = array<i64: 832, 128>}, {pipeline_mode = #tpu.pipeline_mode<synchronous>, transform_indices = @transform_1, window_bounds = array<i64: 832, 128>}, {pipeline_mode = #tpu.pipeline_mode<synchronous>, transform_indices = @transform_2, window_bounds = array<i64: 832, 128>}, {transform_indices = @transform_3, window_bounds = array<i64: 832, 128>}]} {
    %c0 = arith.constant 0 : index
    %c0_0 = arith.constant 0 : index
    %0 = vector.load %arg1[%c0, %c0_0] : memref<832x128xf32, #tpu.memory_space<vmem>>, vector<832x128xf32>
    %c0_1 = arith.constant 0 : index
    %c0_2 = arith.constant 0 : index
    %1 = vector.load %arg2[%c0_1, %c0_2] : memref<832x128xf32, #tpu.memory_space<vmem>>, vector<832x128xf32>
    %2 = arith.subf %0, %1 : vector<832x128xf32>
    %c0_3 = arith.constant 0 : index
    %c0_4 = arith.constant 0 : index
    %3 = vector.load %arg3[%c0_3, %c0_4] : memref<832x128xf32, #tpu.memory_space<vmem>>, vector<832x128xf32>
    %4 = arith.mulf %2, %3 : vector<832x128xf32>
    %c0_5 = arith.constant 0 : index
    %c0_6 = arith.constant 0 : index
    %5 = vector.load %arg4[%c0_5, %c0_6] : memref<832x128xf32, #tpu.memory_space<vmem>>, vector<832x128xf32>
    tpu.vector_store %arg4[%c0_5, %c0_6], %4 {strides = array<i32>} : memref<832x128xf32, #tpu.memory_space<vmem>>, vector<832x128xf32>,
    return
  }
  func.func @transform_0(%arg0: i32) -> (i32, i32) {
    %c0_i32 = arith.constant 0 : i32
    %c0_i32_0 = arith.constant 0 : i32
    return %arg0, %c0_i32 : i32, i32
  }
  func.func @transform_1(%arg0: i32) -> (i32, i32) {
    %c0_i32 = arith.constant 0 : i32
    %c0_i32_0 = arith.constant 0 : i32
    %c0_i32_1 = arith.constant 0 : i32
    return %c0_i32, %c0_i32_0 : i32, i32
  }
  func.func @transform_2(%arg0: i32) -> (i32, i32) {
    %c0_i32 = arith.constant 0 : i32
    %c0_i32_0 = arith.constant 0 : i32
    %c0_i32_1 = arith.constant 0 : i32
    return %c0_i32, %c0_i32_0 : i32, i32
  }
  func.func @transform_3(%arg0: i32) -> (i32, i32) {
    %c0_i32 = arith.constant 0 : i32
    %c0_i32_0 = arith.constant 0 : i32
    return %arg0, %c0_i32 : i32, i32
  }
}

</mosaic_0001>

<llo_original>
// kernel: _normalize_aligned.1
$region0: #{_normalize_aligned.1}
  #allocation0 [shape = 'u32[]', space=smem, size = 0x4, offset = 0x4, fixed_abs, tag = 'smem constant byte address 0x4 - core index']
  #allocation1 [shape = 'u32[144,128]{1,0:T(1,128)}', space=vmem, size = 0x12000, scoped, tag = 'internal scratch']
  %s0 = inlined_call_operand.vmem [shape: f32[1664,128], index: 0, kind: input, shape index: {}]
  %s1 = inlined_call_operand.vmem [shape: f32[832,128], index: 1, kind: input, shape index: {}]
  %s2 = inlined_call_operand.vmem [shape: f32[832,128], index: 2, kind: input, shape index: {}]
  %s3 = inlined_call_operand.vmem [shape: f32[1664,128], index: 3, kind: output, shape index: {}]
  %s4 = sld [smem:[#allocation0]]
  $region45: #{_normalize_aligned.1} parent=0
    _
  %s6 = ssub.s32 1, %s4
  %s7 = scalar_select 0, %s6, %s4
  loop: start=0, step=1, limit=4
  $region2: #{_normalize_aligned.1} parent=0 // loop_pre_header
    _
  $region3: #{_normalize_aligned.1} parent=0 // loop_header
    %s9 = sphi 0, %s13
    %p10 = scmp.ge.s32.totalorder %s9, 4
    %s19 = sphi 0, %s21
    %s22 = sphi 0, %s19
    %s23 = sphi 0, %s22
    %s39 = sphi 0, %s23
    %s43 = sphi 0, %s43
    %s45 = sphi 0, %s43
    %s46 = sphi 0, %s45
    %s60 = sphi 0, %s46
    %s64 = sphi 0, %s64
    %s66 = sphi 0, %s64
    %s67 = sphi 0, %s66
    %s81 = sphi 0, %s67
    %s87 = sphi 0, %s89
    %s90 = sphi 0, %s87
    %s91 = sphi 0, %s90
    %s107 = sphi 0, %s91
  $region4: #{_normalize_aligned.1} parent=0 // loop_header_branch
    %12 = sbr.rel (%p10) target = $region8
  $region5: #{_normalize_aligned.1} parent=0 // loop_body
    %s14 = ssub.s32 %s9, 1
    %s15 = ssub.s32 %s9, 2
    %s16 = sadd.s32 %s9, 1
    %s17 = ssub.s32 %s9, %s16
    %p18 = scmp.eq.s32.totalorder %s17, 0
    %s20 = sadd.s32 %s19, 1
    %s21 = scalar_select %p18, %s19, %s20
    %p24 = pneg %p18
    %p25 = scmp.eq.s32.totalorder %s9, 1
    %p26 = por %p24, %p25
    %p27 = scmp.ne.s32.totalorder %s19, %s22
    %p28 = scmp.eq.s32.totalorder %s9, 0
    %p29 = por %p27, %p28
    %p30 = scmp.ne.s32.totalorder %s19, %s22
    %p31 = scmp.eq.s32.totalorder %s14, 1
    %p32 = por %p30, %p31
    %p33 = scmp.ne.s32.totalorder %s22, %s23
    %p34 = scmp.eq.s32.totalorder %s14, 0
    %p35 = por %p33, %p34
    %p36 = scmp.ne.s32.totalorder %s22, %s23
    %p37 = scmp.eq.s32.totalorder %s15, 1
    %p38 = por %p36, %p37
    %p40 = scmp.ne.s32.totalorder %s23, %s39
    %p41 = scmp.eq.s32.totalorder %s15, 0
    %p42 = por %p40, %p41
    %s44 = sadd.s32 %s43, 1
    %p47 = scmp.eq.s32.totalorder %s9, 1
    %p48 = scmp.ne.s32.totalorder %s43, %s45
    %p49 = scmp.eq.s32.totalorder %s9, 0
    %p50 = por %p48, %p49
    %p51 = scmp.ne.s32.totalorder %s43, %s45
    %p52 = scmp.eq.s32.totalorder %s14, 1
    %p53 = por %p51, %p52
    %p54 = scmp.ne.s32.totalorder %s45, %s46
    %p55 = scmp.eq.s32.totalorder %s14, 0
    %p56 = por %p54, %p55
    %p57 = scmp.ne.s32.totalorder %s45, %s46
    %p58 = scmp.eq.s32.totalorder %s15, 1
    %p59 = por %p57, %p58
    %p61 = scmp.ne.s32.totalorder %s46, %s60
    %p62 = scmp.eq.s32.totalorder %s15, 0
    %p63 = por %p61, %p62
    %s65 = sadd.s32 %s64, 1
    %p68 = scmp.eq.s32.totalorder %s9, 1
    %p69 = scmp.ne.s32.totalorder %s64, %s66
    %p70 = scmp.eq.s32.totalorder %s9, 0
    %p71 = por %p69, %p70
    %p72 = scmp.ne.s32.totalorder %s64, %s66
    %p73 = scmp.eq.s32.totalorder %s14, 1
    %p74 = por %p72, %p73
    %p75 = scmp.ne.s32.totalorder %s66, %s67
    %p76 = scmp.eq.s32.totalorder %s14, 0
    %p77 = por %p75, %p76
    %p78 = scmp.ne.s32.totalorder %s66, %s67
    %p79 = scmp.eq.s32.totalorder %s15, 1
    %p80 = por %p78, %p79
    %p82 = scmp.ne.s32.totalorder %s67, %s81
    %p83 = scmp.eq.s32.totalorder %s15, 0
    %p84 = por %p82, %p83
    %s85 = ssub.s32 %s9, %s16
    %p86 = scmp.eq.s32.totalorder %s85, 0
    %s88 = sadd.s32 %s87, 1
    %s89 = scalar_select %p86, %s87, %s88
    %p92 = pneg %p86
    %p93 = scmp.eq.s32.totalorder %s9, 1
    %p94 = por %p92, %p93
    %p95 = scmp.ne.s32.totalorder %s87, %s90
    %p96 = scmp.eq.s32.totalorder %s9, 0
    %p97 = por %p95, %p96
    %p98 = scmp.ne.s32.totalorder %s87, %s90
    %p99 = scmp.eq.s32.totalorder %s14, 1
    %p100 = por %p98, %p99
    %p101 = scmp.ne.s32.totalorder %s90, %s91
    %p102 = scmp.eq.s32.totalorder %s14, 0
    %p103 = por %p101, %p102
    %p104 = scmp.ne.s32.totalorder %s90, %s91
    %p105 = scmp.eq.s32.totalorder %s15, 1
    %p106 = por %p104, %p105
    %p108 = scmp.ne.s32.totalorder %s91, %s107
    %p109 = scmp.eq.s32.totalorder %s15, 0
    %p110 = por %p108, %p109
    %p111 = scmp.le.s32.totalorder 1, %s9
    %p112 = scmp.lt.s32.totalorder %s9, 3
    %p113 = pnand %p111, %p112
    %p114 = pneg %p113
    // Predicated region
    $region9: #{_normalize_aligned.1} parent=5 // pred_check
      _
    $region10: #{_normalize_aligned.1} parent=5 // pred_check_branch
      %116 = sbr.rel (%p113) target = $region12
    $region11: #{_normalize_aligned.1} parent=5 // pred_region
      %s117 = ssub.s32 %s9, 1
      // Predicated region
      $region13: #{_normalize_aligned.1} parent=11 // pred_check
        %p118 = pneg %p56
      $region14: #{_normalize_aligned.1} parent=11 // pred_check_branch
        %120 = sbr.rel (%p118) target = $region16
      $region15: #{_normalize_aligned.1} parent=11 // pred_region
        _
      $region16: #{_normalize_aligned.1} parent=11 // pred_fallthru
        _
      // Predicated region
      $region17: #{_normalize_aligned.1} parent=11 // pred_check
        %p121 = pneg %p77
      $region18: #{_normalize_aligned.1} parent=11 // pred_check_branch
        %123 = sbr.rel (%p121) target = $region20
      $region19: #{_normalize_aligned.1} parent=11 // pred_region
        _
      $region20: #{_normalize_aligned.1} parent=11 // pred_fallthru
        _
    $region12: #{_normalize_aligned.1} parent=5 // pred_fallthru
      _
    %p124 = scmp.lt.s32.totalorder %s9, 2
    // Predicated region
    $region21: #{_normalize_aligned.1} parent=5 // pred_check
      %p125 = pneg %p124
    $region22: #{_normalize_aligned.1} parent=5 // pred_check_branch
      %127 = sbr.rel (%p125) target = $region24
    $region23: #{_normalize_aligned.1} parent=5 // pred_region
      // Predicated region
      $region25: #{_normalize_aligned.1} parent=23 // pred_check
        %p128 = pneg %p29
      $region26: #{_normalize_aligned.1} parent=23 // pred_check_branch
        %130 = sbr.rel (%p128) target = $region28
      $region27: #{_normalize_aligned.1} parent=23 // pred_region
        %s131 = smul.u32 104, %s9
        %p132 = scmp.lt.s32.totalorder %s131, 207
        %s133 = scalar_select %p132, %s131, 207
        %s134 = smul.addr %s133, 8
        %s135 = scalar_lea.vmem %s0, %s134
        %s136 = smul.u32 104, %s9
      $region28: #{_normalize_aligned.1} parent=23 // pred_fallthru
        _
    $region24: #{_normalize_aligned.1} parent=5 // pred_fallthru
      _
    %p137 = scmp.le.s32.totalorder 1, %s9
    %p138 = scmp.lt.s32.totalorder %s9, 3
    %p139 = pnand %p137, %p138
    %p140 = pneg %p139
    // Predicated region
    $region29: #{_normalize_aligned.1} parent=5 // pred_check
      _
    $region30: #{_normalize_aligned.1} parent=5 // pred_check_branch
      %142 = sbr.rel (%p139) target = $region32
    $region31: #{_normalize_aligned.1} parent=5 // pred_region
      %s143 = ssub.s32 %s9, 1
      %s144 = smul.u32 104, %s14
      %p145 = scmp.lt.s32.totalorder %s144, 207
      %s146 = scalar_select %p145, %s144, 207
      %s147 = smul.addr %s146, 8
      %s148 = scalar_lea.vmem %s0, %s147
      %p149 = pneg %p35
      %p150 = pneg %p32
      %p151 = pneg %p56
      %p152 = pneg %p53
      %p153 = pneg %p77
      %p154 = pneg %p74
      %p155 = pneg %p103
      %p156 = pneg %p100
      %s157 = smul.u32 104, %s14
      %p158 = scmp.lt.s32.totalorder %s157, 207
      %s159 = scalar_select %p158, %s157, 207
      %s160 = smul.addr %s159, 8
      %s161 = scalar_lea.vmem %s3, %s160
      %s162 = smul.u32 104, %s14
      %p163 = scmp.lt.s32.totalorder %s162, 207
      %s164 = scalar_select %p163, %s162, 207
      %s165 = smul.addr %s164, 8
      %s166 = scalar_lea.vmem %s0, %s165
      %s167 = smul.u32 104, %s14
      %s168 = smul.u32 104, %s14
      %p169 = scmp.lt.s32.totalorder %s168, 207
      %s170 = scalar_select %p169, %s168, 207
      %s171 = smul.addr %s170, 8
      %s172 = scalar_lea.vmem %s3, %s171
      %s173 = smul.u32 104, %s14
      %v174 = vld [vmem:[%s166] sm:$0xff]
      %v175 = vld [vmem:[%s166 + $0x8] sm:$0xff]
      %v176 = vld [vmem:[%s166 + $0x10] sm:$0xff]
      %v177 = vld [vmem:[%s166 + $0x18] sm:$0xff]
      %v178 = vld [vmem:[%s166 + $0x20] sm:$0xff]
      %v179 = vld [vmem:[%s166 + $0x28] sm:$0xff]
      %v180 = vld [vmem:[%s166 + $0x30] sm:$0xff]
      %v181 = vld [vmem:[%s166 + $0x38] sm:$0xff]
      %v182 = vld [vmem:[%s166 + $0x40] sm:$0xff]
      %v183 = vld [vmem:[%s166 + $0x48] sm:$0xff]
      %v184 = vld [vmem:[%s166 + $0x50] sm:$0xff]
      %v185 = vld [vmem:[%s166 + $0x58] sm:$0xff]
      %v186 = vld [vmem:[%s166 + $0x60] sm:$0xff]
      %v187 = vld [vmem:[%s166 + $0x68] sm:$0xff]
      %v188 = vld [vmem:[%s166 + $0x70] sm:$0xff]
      %v189 = vld [vmem:[%s166 + $0x78] sm:$0xff]
      %v190 = vld [vmem:[%s166 + $0x80] sm:$0xff]
      %v191 = vld [vmem:[%s166 + $0x88] sm:$0xff]
      %v192 = vld [vmem:[%s166 + $0x90] sm:$0xff]
      %v193 = vld [vmem:[%s166 + $0x98] sm:$0xff]
      %v194 = vld [vmem:[%s166 + $0xa0] sm:$0xff]
      %v195 = vld [vmem:[%s166 + $0xa8] sm:$0xff]
      %v196 = vld [vmem:[%s166 + $0xb0] sm:$0xff]
      %v197 = vld [vmem:[%s166 + $0xb8] sm:$0xff]
      %v198 = vld [vmem:[%s166 + $0xc0] sm:$0xff]
      %v199 = vld [vmem:[%s166 + $0xc8] sm:$0xff]
      %v200 = vld [vmem:[%s166 + $0xd0] sm:$0xff]
      %v201 = vld [vmem:[%s166 + $0xd8] sm:$0xff]
      %v202 = vld [vmem:[%s166 + $0xe0] sm:$0xff]
      %v203 = vld [vmem:[%s166 + $0xe8] sm:$0xff]
      %v204 = vld [vmem:[%s166 + $0xf0] sm:$0xff]
      %v205 = vld [vmem:[%s166 + $0xf8] sm:$0xff]
      %v206 = vld [vmem:[%s166 + $0x100] sm:$0xff]
      %v207 = vld [vmem:[%s166 + $0x108] sm:$0xff]
      %v208 = vld [vmem:[%s166 + $0x110] sm:$0xff]
      %v209 = vld [vmem:[%s166 + $0x118] sm:$0xff]
      %v210 = vld [vmem:[%s166 + $0x120] sm:$0xff]
      %v211 = vld [vmem:[%s166 + $0x128] sm:$0xff]
      %v212 = vld [vmem:[%s166 + $0x130] sm:$0xff]
      %v213 = vld [vmem:[%s166 + $0x138] sm:$0xff]
      %v214 = vld [vmem:[%s166 + $0x140] sm:$0xff]
      %v215 = vld [vmem:[%s166 + $0x148] sm:$0xff]
      %v216 = vld [vmem:[%s166 + $0x150] sm:$0xff]
      %v217 = vld [vmem:[%s166 + $0x158] sm:$0xff]
      %v218 = vld [vmem:[%s166 + $0x160] sm:$0xff]
      %v219 = vld [vmem:[%s166 + $0x168] sm:$0xff]
      %v220 = vld [vmem:[%s166 + $0x170] sm:$0xff]
      %v221 = vld [vmem:[%s166 + $0x178] sm:$0xff]
      %v222 = vld [vmem:[%s166 + $0x180] sm:$0xff]
      %v223 = vld [vmem:[%s166 + $0x188] sm:$0xff]
      %v224 = vld [vmem:[%s166 + $0x190] sm:$0xff]
      %v225 = vld [vmem:[%s166 + $0x198] sm:$0xff]
      %v226 = vld [vmem:[%s166 + $0x1a0] sm:$0xff]
      %v227 = vld [vmem:[%s166 + $0x1a8] sm:$0xff]
      %v228 = vld [vmem:[%s166 + $0x1b0] sm:$0xff]
      %v229 = vld [vmem:[%s166 + $0x1b8] sm:$0xff]
      %v230 = vld [vmem:[%s166 + $0x1c0] sm:$0xff]
      %v231 = vld [vmem:[%s166 + $0x1c8] sm:$0xff]
      %v232 = vld [vmem:[%s166 + $0x1d0] sm:$0xff]
      %v233 = vld [vmem:[%s166 + $0x1d8] sm:$0xff]
      %v234 = vld [vmem:[%s166 + $0x1e0] sm:$0xff]
      %v235 = vld [vmem:[%s166 + $0x1e8] sm:$0xff]
      %v236 = vld [vmem:[%s166 + $0x1f0] sm:$0xff]
      %v237 = vld [vmem:[%s166 + $0x1f8] sm:$0xff]
      %v238 = vld [vmem:[%s166 + $0x200] sm:$0xff]
      %v239 = vld [vmem:[%s166 + $0x208] sm:$0xff]
      %v240 = vld [vmem:[%s166 + $0x210] sm:$0xff]
      %v241 = vld [vmem:[%s166 + $0x218] sm:$0xff]
      %v242 = vld [vmem:[%s166 + $0x220] sm:$0xff]
      %v243 = vld [vmem:[%s166 + $0x228] sm:$0xff]
      %v244 = vld [vmem:[%s166 + $0x230] sm:$0xff]
      %v245 = vld [vmem:[%s166 + $0x238] sm:$0xff]
      %v246 = vld [vmem:[%s166 + $0x240] sm:$0xff]
      %v247 = vld [vmem:[%s166 + $0x248] sm:$0xff]
      %v248 = vld [vmem:[%s166 + $0x250] sm:$0xff]
      %v249 = vld [vmem:[%s166 + $0x258] sm:$0xff]
      %v250 = vld [vmem:[%s166 + $0x260] sm:$0xff]
      %v251 = vld [vmem:[%s166 + $0x268] sm:$0xff]
      %v252 = vld [vmem:[%s166 + $0x270] sm:$0xff]
      %v253 = vld [vmem:[%s166 + $0x278] sm:$0xff]
      %v254 = vld [vmem:[%s166 + $0x280] sm:$0xff]
      %v255 = vld [vmem:[%s166 + $0x288] sm:$0xff]
      %v256 = vld [vmem:[%s166 + $0x290] sm:$0xff]
      %v257 = vld [vmem:[%s166 + $0x298] sm:$0xff]
      %v258 = vld [vmem:[%s166 + $0x2a0] sm:$0xff]
      %v259 = vld [vmem:[%s166 + $0x2a8] sm:$0xff]
      %v260 = vld [vmem:[%s166 + $0x2b0] sm:$0xff]
      %v261 = vld [vmem:[%s166 + $0x2b8] sm:$0xff]
      %v262 = vld [vmem:[%s166 + $0x2c0] sm:$0xff]
      %v263 = vld [vmem:[%s166 + $0x2c8] sm:$0xff]
      %v264 = vld [vmem:[%s166 + $0x2d0] sm:$0xff]
      %v265 = vld [vmem:[%s166 + $0x2d8] sm:$0xff]
      %v266 = vld [vmem:[%s166 + $0x2e0] sm:$0xff]
      %v267 = vld [vmem:[%s166 + $0x2e8] sm:$0xff]
      %v268 = vld [vmem:[%s166 + $0x2f0] sm:$0xff]
      %v269 = vld [vmem:[%s166 + $0x2f8] sm:$0xff]
      %v270 = vld [vmem:[%s166 + $0x300] sm:$0xff]
      %v271 = vld [vmem:[%s166 + $0x308] sm:$0xff]
      %v272 = vld [vmem:[%s166 + $0x310] sm:$0xff]
      %v273 = vld [vmem:[%s166 + $0x318] sm:$0xff]
      %v274 = vld [vmem:[%s166 + $0x320] sm:$0xff]
      %v275 = vld [vmem:[%s166 + $0x328] sm:$0xff]
      %v276 = vld [vmem:[%s166 + $0x330] sm:$0xff]
      %v277 = vld [vmem:[%s166 + $0x338] sm:$0xff]
      %v278 = vld [vmem:[%s1] sm:$0xff]
      %v279 = vld [vmem:[%s1 + $0x8] sm:$0xff]
      %v280 = vld [vmem:[%s1 + $0x10] sm:$0xff]
      %v281 = vld [vmem:[%s1 + $0x18] sm:$0xff]
      %v282 = vld [vmem:[%s1 + $0x20] sm:$0xff]
      %v283 = vld [vmem:[%s1 + $0x28] sm:$0xff]
      %v284 = vld [vmem:[%s1 + $0x30] sm:$0xff]
      %v285 = vld [vmem:[%s1 + $0x38] sm:$0xff]
      %v286 = vld [vmem:[%s1 + $0x40] sm:$0xff]
      %v287 = vld [vmem:[%s1 + $0x48] sm:$0xff]
      %v288 = vld [vmem:[%s1 + $0x50] sm:$0xff]
      %v289 = vld [vmem:[%s1 + $0x58] sm:$0xff]
      %v290 = vld [vmem:[%s1 + $0x60] sm:$0xff]
      %v291 = vld [vmem:[%s1 + $0x68] sm:$0xff]
      %v292 = vld [vmem:[%s1 + $0x70] sm:$0xff]
      %v293 = vld [vmem:[%s1 + $0x78] sm:$0xff]
      %v294 = vld [vmem:[%s1 + $0x80] sm:$0xff]
      %v295 = vld [vmem:[%s1 + $0x88] sm:$0xff]
      %v296 = vld [vmem:[%s1 + $0x90] sm:$0xff]
      %v297 = vld [vmem:[%s1 + $0x98] sm:$0xff]
      %v298 = vld [vmem:[%s1 + $0xa0] sm:$0xff]
      %v299 = vld [vmem:[%s1 + $0xa8] sm:$0xff]
      %v300 = vld [vmem:[%s1 + $0xb0] sm:$0xff]
      %v301 = vld [vmem:[%s1 + $0xb8] sm:$0xff]
      %v302 = vld [vmem:[%s1 + $0xc0] sm:$0xff]
      %v303 = vld [vmem:[%s1 + $0xc8] sm:$0xff]
      %v304 = vld [vmem:[%s1 + $0xd0] sm:$0xff]
      %v305 = vld [vmem:[%s1 + $0xd8] sm:$0xff]
      %v306 = vld [vmem:[%s1 + $0xe0] sm:$0xff]
      %v307 = vld [vmem:[%s1 + $0xe8] sm:$0xff]
      %v308 = vld [vmem:[%s1 + $0xf0] sm:$0xff]
      %v309 = vld [vmem:[%s1 + $0xf8] sm:$0xff]
      %v310 = vld [vmem:[%s1 + $0x100] sm:$0xff]
      %v311 = vld [vmem:[%s1 + $0x108] sm:$0xff]
      %v312 = vld [vmem:[%s1 + $0x110] sm:$0xff]
      %v313 = vld [vmem:[%s1 + $0x118] sm:$0xff]
      %v314 = vld [vmem:[%s1 + $0x120] sm:$0xff]
      %v315 = vld [vmem:[%s1 + $0x128] sm:$0xff]
      %v316 = vld [vmem:[%s1 + $0x130] sm:$0xff]
      %v317 = vld [vmem:[%s1 + $0x138] sm:$0xff]
      %v318 = vld [vmem:[%s1 + $0x140] sm:$0xff]
      %v319 = vld [vmem:[%s1 + $0x148] sm:$0xff]
      %v320 = vld [vmem:[%s1 + $0x150] sm:$0xff]
      %v321 = vld [vmem:[%s1 + $0x158] sm:$0xff]
      %v322 = vld [vmem:[%s1 + $0x160] sm:$0xff]
      %v323 = vld [vmem:[%s1 + $0x168] sm:$0xff]
      %v324 = vld [vmem:[%s1 + $0x170] sm:$0xff]
      %v325 = vld [vmem:[%s1 + $0x178] sm:$0xff]
      %v326 = vld [vmem:[%s1 + $0x180] sm:$0xff]
      %v327 = vld [vmem:[%s1 + $0x188] sm:$0xff]
      %v328 = vld [vmem:[%s1 + $0x190] sm:$0xff]
      %v329 = vld [vmem:[%s1 + $0x198] sm:$0xff]
      %v330 = vld [vmem:[%s1 + $0x1a0] sm:$0xff]
      %v331 = vld [vmem:[%s1 + $0x1a8] sm:$0xff]
      %v332 = vld [vmem:[%s1 + $0x1b0] sm:$0xff]
      %v333 = vld [vmem:[%s1 + $0x1b8] sm:$0xff]
      %v334 = vld [vmem:[%s1 + $0x1c0] sm:$0xff]
      %v335 = vld [vmem:[%s1 + $0x1c8] sm:$0xff]
      %v336 = vld [vmem:[%s1 + $0x1d0] sm:$0xff]
      %v337 = vld [vmem:[%s1 + $0x1d8] sm:$0xff]
      %v338 = vld [vmem:[%s1 + $0x1e0] sm:$0xff]
      %v339 = vld [vmem:[%s1 + $0x1e8] sm:$0xff]
      %v340 = vld [vmem:[%s1 + $0x1f0] sm:$0xff]
      %v341 = vld [vmem:[%s1 + $0x1f8] sm:$0xff]
      %v342 = vld [vmem:[%s1 + $0x200] sm:$0xff]
      %v343 = vld [vmem:[%s1 + $0x208] sm:$0xff]
      %v344 = vld [vmem:[%s1 + $0x210] sm:$0xff]
      %v345 = vld [vmem:[%s1 + $0x218] sm:$0xff]
      %v346 = vld [vmem:[%s1 + $0x220] sm:$0xff]
      %v347 = vld [vmem:[%s1 + $0x228] sm:$0xff]
      %v348 = vld [vmem:[%s1 + $0x230] sm:$0xff]
      %v349 = vld [vmem:[%s1 + $0x238] sm:$0xff]
      %v350 = vld [vmem:[%s1 + $0x240] sm:$0xff]
      %v351 = vld [vmem:[%s1 + $0x248] sm:$0xff]
      %v352 = vld [vmem:[%s1 + $0x250] sm:$0xff]
      %v353 = vld [vmem:[%s1 + $0x258] sm:$0xff]
      %v354 = vld [vmem:[%s1 + $0x260] sm:$0xff]
      %v355 = vld [vmem:[%s1 + $0x268] sm:$0xff]
      %v356 = vld [vmem:[%s1 + $0x270] sm:$0xff]
      %v357 = vld [vmem:[%s1 + $0x278] sm:$0xff]
      %v358 = vld [vmem:[%s1 + $0x280] sm:$0xff]
      %v359 = vld [vmem:[%s1 + $0x288] sm:$0xff]
      %v360 = vld [vmem:[%s1 + $0x290] sm:$0xff]
      %v361 = vld [vmem:[%s1 + $0x298] sm:$0xff]
      %v362 = vld [vmem:[%s1 + $0x2a0] sm:$0xff]
      %v363 = vld [vmem:[%s1 + $0x2a8] sm:$0xff]
      %v364 = vld [vmem:[%s1 + $0x2b0] sm:$0xff]
      %v365 = vld [vmem:[%s1 + $0x2b8] sm:$0xff]
      %v366 = vld [vmem:[%s1 + $0x2c0] sm:$0xff]
      %v367 = vld [vmem:[%s1 + $0x2c8] sm:$0xff]
      %v368 = vld [vmem:[%s1 + $0x2d0] sm:$0xff]
      %v369 = vld [vmem:[%s1 + $0x2d8] sm:$0xff]
      %v370 = vld [vmem:[%s1 + $0x2e0] sm:$0xff]
      %v371 = vld [vmem:[%s1 + $0x2e8] sm:$0xff]
      %v372 = vld [vmem:[%s1 + $0x2f0] sm:$0xff]
      %v373 = vld [vmem:[%s1 + $0x2f8] sm:$0xff]
      %v374 = vld [vmem:[%s1 + $0x300] sm:$0xff]
      %v375 = vld [vmem:[%s1 + $0x308] sm:$0xff]
      %v376 = vld [vmem:[%s1 + $0x310] sm:$0xff]
      %v377 = vld [vmem:[%s1 + $0x318] sm:$0xff]
      %v378 = vld [vmem:[%s1 + $0x320] sm:$0xff]
      %v379 = vld [vmem:[%s1 + $0x328] sm:$0xff]
      %v380 = vld [vmem:[%s1 + $0x330] sm:$0xff]
      %v381 = vld [vmem:[%s1 + $0x338] sm:$0xff]
      %v382 = vsub.f32 %v174, %v278
      %v383 = vsub.f32 %v175, %v279
      %v384 = vsub.f32 %v176, %v280
      %v385 = vsub.f32 %v177, %v281
      %v386 = vsub.f32 %v178, %v282
      %v387 = vsub.f32 %v179, %v283
      %v388 = vsub.f32 %v180, %v284
      %v389 = vsub.f32 %v181, %v285
      %v390 = vsub.f32 %v182, %v286
      %v391 = vsub.f32 %v183, %v287
      %v392 = vsub.f32 %v184, %v288
      %v393 = vsub.f32 %v185, %v289
      %v394 = vsub.f32 %v186, %v290
      %v395 = vsub.f32 %v187, %v291
      %v396 = vsub.f32 %v188, %v292
      %v397 = vsub.f32 %v189, %v293
      %v398 = vsub.f32 %v190, %v294
      %v399 = vsub.f32 %v191, %v295
      %v400 = vsub.f32 %v192, %v296
      %v401 = vsub.f32 %v193, %v297
      %v402 = vsub.f32 %v194, %v298
      %v403 = vsub.f32 %v195, %v299
      %v404 = vsub.f32 %v196, %v300
      %v405 = vsub.f32 %v197, %v301
      %v406 = vsub.f32 %v198, %v302
      %v407 = vsub.f32 %v199, %v303
      %v408 = vsub.f32 %v200, %v304
      %v409 = vsub.f32 %v201, %v305
      %v410 = vsub.f32 %v202, %v306
      %v411 = vsub.f32 %v203, %v307
      %v412 = vsub.f32 %v204, %v308
      %v413 = vsub.f32 %v205, %v309
      %v414 = vsub.f32 %v206, %v310
      %v415 = vsub.f32 %v207, %v311
      %v416 = vsub.f32 %v208, %v312
      %v417 = vsub.f32 %v209, %v313
      %v418 = vsub.f32 %v210, %v314
      %v419 = vsub.f32 %v211, %v315
      %v420 = vsub.f32 %v212, %v316
      %v421 = vsub.f32 %v213, %v317
      %v422 = vsub.f32 %v214, %v318
      %v423 = vsub.f32 %v215, %v319
      %v424 = vsub.f32 %v216, %v320
      %v425 = vsub.f32 %v217, %v321
      %v426 = vsub.f32 %v218, %v322
      %v427 = vsub.f32 %v219, %v323
      %v428 = vsub.f32 %v220, %v324
      %v429 = vsub.f32 %v221, %v325
      %v430 = vsub.f32 %v222, %v326
      %v431 = vsub.f32 %v223, %v327
      %v432 = vsub.f32 %v224, %v328
      %v433 = vsub.f32 %v225, %v329
      %v434 = vsub.f32 %v226, %v330
      %v435 = vsub.f32 %v227, %v331
      %v436 = vsub.f32 %v228, %v332
      %v437 = vsub.f32 %v229, %v333
      %v438 = vsub.f32 %v230, %v334
      %v439 = vsub.f32 %v231, %v335
      %v440 = vsub.f32 %v232, %v336
      %v441 = vsub.f32 %v233, %v337
      %v442 = vsub.f32 %v234, %v338
      %v443 = vsub.f32 %v235, %v339
      %v444 = vsub.f32 %v236, %v340
      %v445 = vsub.f32 %v237, %v341
      %v446 = vsub.f32 %v238, %v342
      %v447 = vsub.f32 %v239, %v343
      %v448 = vsub.f32 %v240, %v344
      %v449 = vsub.f32 %v241, %v345
      %v450 = vsub.f32 %v242, %v346
      %v451 = vsub.f32 %v243, %v347
      %v452 = vsub.f32 %v244, %v348
      %v453 = vsub.f32 %v245, %v349
      %v454 = vsub.f32 %v246, %v350
      %v455 = vsub.f32 %v247, %v351
      %v456 = vsub.f32 %v248, %v352
      %v457 = vsub.f32 %v249, %v353
      %v458 = vsub.f32 %v250, %v354
      %v459 = vsub.f32 %v251, %v355
      %v460 = vsub.f32 %v252, %v356
      %v461 = vsub.f32 %v253, %v357
      %v462 = vsub.f32 %v254, %v358
      %v463 = vsub.f32 %v255, %v359
      %v464 = vsub.f32 %v256, %v360
      %v465 = vsub.f32 %v257, %v361
      %v466 = vsub.f32 %v258, %v362
      %v467 = vsub.f32 %v259, %v363
      %v468 = vsub.f32 %v260, %v364
      %v469 = vsub.f32 %v261, %v365
      %v470 = vsub.f32 %v262, %v366
      %v471 = vsub.f32 %v263, %v367
      %v472 = vsub.f32 %v264, %v368
      %v473 = vsub.f32 %v265, %v369
      %v474 = vsub.f32 %v266, %v370
      %v475 = vsub.f32 %v267, %v371
      %v476 = vsub.f32 %v268, %v372
      %v477 = vsub.f32 %v269, %v373
      %v478 = vsub.f32 %v270, %v374
      %v479 = vsub.f32 %v271, %v375
      %v480 = vsub.f32 %v272, %v376
      %v481 = vsub.f32 %v273, %v377
      %v482 = vsub.f32 %v274, %v378
      %v483 = vsub.f32 %v275, %v379
      %v484 = vsub.f32 %v276, %v380
      %v485 = vsub.f32 %v277, %v381
      %v486 = vld [vmem:[%s2] sm:$0xff]
      %v487 = vld [vmem:[%s2 + $0x8] sm:$0xff]
      %v488 = vld [vmem:[%s2 + $0x10] sm:$0xff]
      %v489 = vld [vmem:[%s2 + $0x18] sm:$0xff]
      %v490 = vld [vmem:[%s2 + $0x20] sm:$0xff]
      %v491 = vld [vmem:[%s2 + $0x28] sm:$0xff]
      %v492 = vld [vmem:[%s2 + $0x30] sm:$0xff]
      %v493 = vld [vmem:[%s2 + $0x38] sm:$0xff]
      %v494 = vld [vmem:[%s2 + $0x40] sm:$0xff]
      %v495 = vld [vmem:[%s2 + $0x48] sm:$0xff]
      %v496 = vld [vmem:[%s2 + $0x50] sm:$0xff]
      %v497 = vld [vmem:[%s2 + $0x58] sm:$0xff]
      %v498 = vld [vmem:[%s2 + $0x60] sm:$0xff]
      %v499 = vld [vmem:[%s2 + $0x68] sm:$0xff]
      %v500 = vld [vmem:[%s2 + $0x70] sm:$0xff]
      %v501 = vld [vmem:[%s2 + $0x78] sm:$0xff]
      %v502 = vld [vmem:[%s2 + $0x80] sm:$0xff]
      %v503 = vld [vmem:[%s2 + $0x88] sm:$0xff]
      %v504 = vld [vmem:[%s2 + $0x90] sm:$0xff]
      %v505 = vld [vmem:[%s2 + $0x98] sm:$0xff]
      %v506 = vld [vmem:[%s2 + $0xa0] sm:$0xff]
      %v507 = vld [vmem:[%s2 + $0xa8] sm:$0xff]
      %v508 = vld [vmem:[%s2 + $0xb0] sm:$0xff]
      %v509 = vld [vmem:[%s2 + $0xb8] sm:$0xff]
      %v510 = vld [vmem:[%s2 + $0xc0] sm:$0xff]
      %v511 = vld [vmem:[%s2 + $0xc8] sm:$0xff]
      %v512 = vld [vmem:[%s2 + $0xd0] sm:$0xff]
      %v513 = vld [vmem:[%s2 + $0xd8] sm:$0xff]
      %v514 = vld [vmem:[%s2 + $0xe0] sm:$0xff]
      %v515 = vld [vmem:[%s2 + $0xe8] sm:$0xff]
      %v516 = vld [vmem:[%s2 + $0xf0] sm:$0xff]
      %v517 = vld [vmem:[%s2 + $0xf8] sm:$0xff]
      %v518 = vld [vmem:[%s2 + $0x100] sm:$0xff]
      %v519 = vld [vmem:[%s2 + $0x108] sm:$0xff]
      %v520 = vld [vmem:[%s2 + $0x110] sm:$0xff]
      %v521 = vld [vmem:[%s2 + $0x118] sm:$0xff]
      %v522 = vld [vmem:[%s2 + $0x120] sm:$0xff]
      %v523 = vld [vmem:[%s2 + $0x128] sm:$0xff]
      %v524 = vld [vmem:[%s2 + $0x130] sm:$0xff]
      %v525 = vld [vmem:[%s2 + $0x138] sm:$0xff]
      %v526 = vld [vmem:[%s2 + $0x140] sm:$0xff]
      %v527 = vld [vmem:[%s2 + $0x148] sm:$0xff]
      %v528 = vld [vmem:[%s2 + $0x150] sm:$0xff]
      %v529 = vld [vmem:[%s2 + $0x158] sm:$0xff]
      %v530 = vld [vmem:[%s2 + $0x160] sm:$0xff]
      %v531 = vld [vmem:[%s2 + $0x168] sm:$0xff]
      %v532 = vld [vmem:[%s2 + $0x170] sm:$0xff]
      %v533 = vld [vmem:[%s2 + $0x178] sm:$0xff]
      %v534 = vld [vmem:[%s2 + $0x180] sm:$0xff]
      %v535 = vld [vmem:[%s2 + $0x188] sm:$0xff]
      %v536 = vld [vmem:[%s2 + $0x190] sm:$0xff]
      %v537 = vld [vmem:[%s2 + $0x198] sm:$0xff]
      %v538 = vld [vmem:[%s2 + $0x1a0] sm:$0xff]
      %v539 = vld [vmem:[%s2 + $0x1a8] sm:$0xff]
      %v540 = vld [vmem:[%s2 + $0x1b0] sm:$0xff]
      %v541 = vld [vmem:[%s2 + $0x1b8] sm:$0xff]
      %v542 = vld [vmem:[%s2 + $0x1c0] sm:$0xff]
      %v543 = vld [vmem:[%s2 + $0x1c8] sm:$0xff]
      %v544 = vld [vmem:[%s2 + $0x1d0] sm:$0xff]
      %v545 = vld [vmem:[%s2 + $0x1d8] sm:$0xff]
      %v546 = vld [vmem:[%s2 + $0x1e0] sm:$0xff]
      %v547 = vld [vmem:[%s2 + $0x1e8] sm:$0xff]
      %v548 = vld [vmem:[%s2 + $0x1f0] sm:$0xff]
      %v549 = vld [vmem:[%s2 + $0x1f8] sm:$0xff]
      %v550 = vld [vmem:[%s2 + $0x200] sm:$0xff]
      %v551 = vld [vmem:[%s2 + $0x208] sm:$0xff]
      %v552 = vld [vmem:[%s2 + $0x210] sm:$0xff]
      %v553 = vld [vmem:[%s2 + $0x218] sm:$0xff]
      %v554 = vld [vmem:[%s2 + $0x220] sm:$0xff]
      %v555 = vld [vmem:[%s2 + $0x228] sm:$0xff]
      %v556 = vld [vmem:[%s2 + $0x230] sm:$0xff]
      %v557 = vld [vmem:[%s2 + $0x238] sm:$0xff]
      %v558 = vld [vmem:[%s2 + $0x240] sm:$0xff]
      %v559 = vld [vmem:[%s2 + $0x248] sm:$0xff]
      %v560 = vld [vmem:[%s2 + $0x250] sm:$0xff]
      %v561 = vld [vmem:[%s2 + $0x258] sm:$0xff]
      %v562 = vld [vmem:[%s2 + $0x260] sm:$0xff]
      %v563 = vld [vmem:[%s2 + $0x268] sm:$0xff]
      %v564 = vld [vmem:[%s2 + $0x270] sm:$0xff]
      %v565 = vld [vmem:[%s2 + $0x278] sm:$0xff]
      %v566 = vld [vmem:[%s2 + $0x280] sm:$0xff]
      %v567 = vld [vmem:[%s2 + $0x288] sm:$0xff]
      %v568 = vld [vmem:[%s2 + $0x290] sm:$0xff]
      %v569 = vld [vmem:[%s2 + $0x298] sm:$0xff]
      %v570 = vld [vmem:[%s2 + $0x2a0] sm:$0xff]
      %v571 = vld [vmem:[%s2 + $0x2a8] sm:$0xff]
      %v572 = vld [vmem:[%s2 + $0x2b0] sm:$0xff]
      %v573 = vld [vmem:[%s2 + $0x2b8] sm:$0xff]
      %v574 = vld [vmem:[%s2 + $0x2c0] sm:$0xff]
      %v575 = vld [vmem:[%s2 + $0x2c8] sm:$0xff]
      %v576 = vld [vmem:[%s2 + $0x2d0] sm:$0xff]
      %v577 = vld [vmem:[%s2 + $0x2d8] sm:$0xff]
      %v578 = vld [vmem:[%s2 + $0x2e0] sm:$0xff]
      %v579 = vld [vmem:[%s2 + $0x2e8] sm:$0xff]
      %v580 = vld [vmem:[%s2 + $0x2f0] sm:$0xff]
      %v581 = vld [vmem:[%s2 + $0x2f8] sm:$0xff]
      %v582 = vld [vmem:[%s2 + $0x300] sm:$0xff]
      %v583 = vld [vmem:[%s2 + $0x308] sm:$0xff]
      %v584 = vld [vmem:[%s2 + $0x310] sm:$0xff]
      %v585 = vld [vmem:[%s2 + $0x318] sm:$0xff]
      %v586 = vld [vmem:[%s2 + $0x320] sm:$0xff]
      %v587 = vld [vmem:[%s2 + $0x328] sm:$0xff]
      %v588 = vld [vmem:[%s2 + $0x330] sm:$0xff]
      %v589 = vld [vmem:[%s2 + $0x338] sm:$0xff]
      %v590 = vmul.f32 %v382, %v486
      %v591 = vmul.f32 %v383, %v487
      %v592 = vmul.f32 %v384, %v488
      %v593 = vmul.f32 %v385, %v489
      %v594 = vmul.f32 %v386, %v490
      %v595 = vmul.f32 %v387, %v491
      %v596 = vmul.f32 %v388, %v492
      %v597 = vmul.f32 %v389, %v493
      %v598 = vmul.f32 %v390, %v494
      %v599 = vmul.f32 %v391, %v495
      %v600 = vmul.f32 %v392, %v496
      %v601 = vmul.f32 %v393, %v497
      %v602 = vmul.f32 %v394, %v498
      %v603 = vmul.f32 %v395, %v499
      %v604 = vmul.f32 %v396, %v500
      %v605 = vmul.f32 %v397, %v501
      %v606 = vmul.f32 %v398, %v502
      %v607 = vmul.f32 %v399, %v503
      %v608 = vmul.f32 %v400, %v504
      %v609 = vmul.f32 %v401, %v505
      %v610 = vmul.f32 %v402, %v506
      %v611 = vmul.f32 %v403, %v507
      %v612 = vmul.f32 %v404, %v508
      %v613 = vmul.f32 %v405, %v509
      %v614 = vmul.f32 %v406, %v510
      %v615 = vmul.f32 %v407, %v511
      %v616 = vmul.f32 %v408, %v512
      %v617 = vmul.f32 %v409, %v513
      %v618 = vmul.f32 %v410, %v514
      %v619 = vmul.f32 %v411, %v515
      %v620 = vmul.f32 %v412, %v516
      %v621 = vmul.f32 %v413, %v517
      %v622 = vmul.f32 %v414, %v518
      %v623 = vmul.f32 %v415, %v519
      %v624 = vmul.f32 %v416, %v520
      %v625 = vmul.f32 %v417, %v521
      %v626 = vmul.f32 %v418, %v522
      %v627 = vmul.f32 %v419, %v523
      %v628 = vmul.f32 %v420, %v524
      %v629 = vmul.f32 %v421, %v525
      %v630 = vmul.f32 %v422, %v526
      %v631 = vmul.f32 %v423, %v527
      %v632 = vmul.f32 %v424, %v528
      %v633 = vmul.f32 %v425, %v529
      %v634 = vmul.f32 %v426, %v530
      %v635 = vmul.f32 %v427, %v531
      %v636 = vmul.f32 %v428, %v532
      %v637 = vmul.f32 %v429, %v533
      %v638 = vmul.f32 %v430, %v534
      %v639 = vmul.f32 %v431, %v535
      %v640 = vmul.f32 %v432, %v536
      %v641 = vmul.f32 %v433, %v537
      %v642 = vmul.f32 %v434, %v538
      %v643 = vmul.f32 %v435, %v539
      %v644 = vmul.f32 %v436, %v540
      %v645 = vmul.f32 %v437, %v541
      %v646 = vmul.f32 %v438, %v542
      %v647 = vmul.f32 %v439, %v543
      %v648 = vmul.f32 %v440, %v544
      %v649 = vmul.f32 %v441, %v545
      %v650 = vmul.f32 %v442, %v546
      %v651 = vmul.f32 %v443, %v547
      %v652 = vmul.f32 %v444, %v548
      %v653 = vmul.f32 %v445, %v549
      %v654 = vmul.f32 %v446, %v550
      %v655 = vmul.f32 %v447, %v551
      %v656 = vmul.f32 %v448, %v552
      %v657 = vmul.f32 %v449, %v553
      %v658 = vmul.f32 %v450, %v554
      %v659 = vmul.f32 %v451, %v555
      %v660 = vmul.f32 %v452, %v556
      %v661 = vmul.f32 %v453, %v557
      %v662 = vmul.f32 %v454, %v558
      %v663 = vmul.f32 %v455, %v559
      %v664 = vmul.f32 %v456, %v560
      %v665 = vmul.f32 %v457, %v561
      %v666 = vmul.f32 %v458, %v562
      %v667 = vmul.f32 %v459, %v563
      %v668 = vmul.f32 %v460, %v564
      %v669 = vmul.f32 %v461, %v565
      %v670 = vmul.f32 %v462, %v566
      %v671 = vmul.f32 %v463, %v567
      %v672 = vmul.f32 %v464, %v568
      %v673 = vmul.f32 %v465, %v569
      %v674 = vmul.f32 %v466, %v570
      %v675 = vmul.f32 %v467, %v571
      %v676 = vmul.f32 %v468, %v572
      %v677 = vmul.f32 %v469, %v573
      %v678 = vmul.f32 %v470, %v574
      %v679 = vmul.f32 %v471, %v575
      %v680 = vmul.f32 %v472, %v576
      %v681 = vmul.f32 %v473, %v577
      %v682 = vmul.f32 %v474, %v578
      %v683 = vmul.f32 %v475, %v579
      %v684 = vmul.f32 %v476, %v580
      %v685 = vmul.f32 %v477, %v581
      %v686 = vmul.f32 %v478, %v582
      %v687 = vmul.f32 %v479, %v583
      %v688 = vmul.f32 %v480, %v584
      %v689 = vmul.f32 %v481, %v585
      %v690 = vmul.f32 %v482, %v586
      %v691 = vmul.f32 %v483, %v587
      %v692 = vmul.f32 %v484, %v588
      %v693 = vmul.f32 %v485, %v589
      %694 = vst [vmem:[%s172] sm:$0xff] %v590
      %695 = vst [vmem:[%s172 + $0x8] sm:$0xff] %v591
      %696 = vst [vmem:[%s172 + $0x10] sm:$0xff] %v592
      %697 = vst [vmem:[%s172 + $0x18] sm:$0xff] %v593
      %698 = vst [vmem:[%s172 + $0x20] sm:$0xff] %v594
      %699 = vst [vmem:[%s172 + $0x28] sm:$0xff] %v595
      %700 = vst [vmem:[%s172 + $0x30] sm:$0xff] %v596
      %701 = vst [vmem:[%s172 + $0x38] sm:$0xff] %v597
      %702 = vst [vmem:[%s172 + $0x40] sm:$0xff] %v598
      %703 = vst [vmem:[%s172 + $0x48] sm:$0xff] %v599
      %704 = vst [vmem:[%s172 + $0x50] sm:$0xff] %v600
      %705 = vst [vmem:[%s172 + $0x58] sm:$0xff] %v601
      %706 = vst [vmem:[%s172 + $0x60] sm:$0xff] %v602
      %707 = vst [vmem:[%s172 + $0x68] sm:$0xff] %v603
      %708 = vst [vmem:[%s172 + $0x70] sm:$0xff] %v604
      %709 = vst [vmem:[%s172 + $0x78] sm:$0xff] %v605
      %710 = vst [vmem:[%s172 + $0x80] sm:$0xff] %v606
      %711 = vst [vmem:[%s172 + $0x88] sm:$0xff] %v607
      %712 = vst [vmem:[%s172 + $0x90] sm:$0xff] %v608
      %713 = vst [vmem:[%s172 + $0x98] sm:$0xff] %v609
      %714 = vst [vmem:[%s172 + $0xa0] sm:$0xff] %v610
      %715 = vst [vmem:[%s172 + $0xa8] sm:$0xff] %v611
      %716 = vst [vmem:[%s172 + $0xb0] sm:$0xff] %v612
      %717 = vst [vmem:[%s172 + $0xb8] sm:$0xff] %v613
      %718 = vst [vmem:[%s172 + $0xc0] sm:$0xff] %v614
      %719 = vst [vmem:[%s172 + $0xc8] sm:$0xff] %v615
      %720 = vst [vmem:[%s172 + $0xd0] sm:$0xff] %v616
      %721 = vst [vmem:[%s172 + $0xd8] sm:$0xff] %v617
      %722 = vst [vmem:[%s172 + $0xe0] sm:$0xff] %v618
      %723 = vst [vmem:[%s172 + $0xe8] sm:$0xff] %v619
      %724 = vst [vmem:[%s172 + $0xf0] sm:$0xff] %v620
      %725 = vst [vmem:[%s172 + $0xf8] sm:$0xff] %v621
      %726 = vst [vmem:[%s172 + $0x100] sm:$0xff] %v622
      %727 = vst [vmem:[%s172 + $0x108] sm:$0xff] %v623
      %728 = vst [vmem:[%s172 + $0x110] sm:$0xff] %v624
      %729 = vst [vmem:[%s172 + $0x118] sm:$0xff] %v625
      %730 = vst [vmem:[%s172 + $0x120] sm:$0xff] %v626
      %731 = vst [vmem:[%s172 + $0x128] sm:$0xff] %v627
      %732 = vst [vmem:[%s172 + $0x130] sm:$0xff] %v628
      %733 = vst [vmem:[%s172 + $0x138] sm:$0xff] %v629
      %734 = vst [vmem:[%s172 + $0x140] sm:$0xff] %v630
      %735 = vst [vmem:[%s172 + $0x148] sm:$0xff] %v631
      %736 = vst [vmem:[%s172 + $0x150] sm:$0xff] %v632
      %737 = vst [vmem:[%s172 + $0x158] sm:$0xff] %v633
      %738 = vst [vmem:[%s172 + $0x160] sm:$0xff] %v634
      %739 = vst [vmem:[%s172 + $0x168] sm:$0xff] %v635
      %740 = vst [vmem:[%s172 + $0x170] sm:$0xff] %v636
      %741 = vst [vmem:[%s172 + $0x178] sm:$0xff] %v637
      %742 = vst [vmem:[%s172 + $0x180] sm:$0xff] %v638
      %743 = vst [vmem:[%s172 + $0x188] sm:$0xff] %v639
      %744 = vst [vmem:[%s172 + $0x190] sm:$0xff] %v640
      %745 = vst [vmem:[%s172 + $0x198] sm:$0xff] %v641
      %746 = vst [vmem:[%s172 + $0x1a0] sm:$0xff] %v642
      %747 = vst [vmem:[%s172 + $0x1a8] sm:$0xff] %v643
      %748 = vst [vmem:[%s172 + $0x1b0] sm:$0xff] %v644
      %749 = vst [vmem:[%s172 + $0x1b8] sm:$0xff] %v645
      %750 = vst [vmem:[%s172 + $0x1c0] sm:$0xff] %v646
      %751 = vst [vmem:[%s172 + $0x1c8] sm:$0xff] %v647
      %752 = vst [vmem:[%s172 + $0x1d0] sm:$0xff] %v648
      %753 = vst [vmem:[%s172 + $0x1d8] sm:$0xff] %v649
      %754 = vst [vmem:[%s172 + $0x1e0] sm:$0xff] %v650
      %755 = vst [vmem:[%s172 + $0x1e8] sm:$0xff] %v651
      %756 = vst [vmem:[%s172 + $0x1f0] sm:$0xff] %v652
      %757 = vst [vmem:[%s172 + $0x1f8] sm:$0xff] %v653
      %758 = vst [vmem:[%s172 + $0x200] sm:$0xff] %v654
      %759 = vst [vmem:[%s172 + $0x208] sm:$0xff] %v655
      %760 = vst [vmem:[%s172 + $0x210] sm:$0xff] %v656
      %761 = vst [vmem:[%s172 + $0x218] sm:$0xff] %v657
      %762 = vst [vmem:[%s172 + $0x220] sm:$0xff] %v658
      %763 = vst [vmem:[%s172 + $0x228] sm:$0xff] %v659
      %764 = vst [vmem:[%s172 + $0x230] sm:$0xff] %v660
      %765 = vst [vmem:[%s172 + $0x238] sm:$0xff] %v661
      %766 = vst [vmem:[%s172 + $0x240] sm:$0xff] %v662
      %767 = vst [vmem:[%s172 + $0x248] sm:$0xff] %v663
      %768 = vst [vmem:[%s172 + $0x250] sm:$0xff] %v664
      %769 = vst [vmem:[%s172 + $0x258] sm:$0xff] %v665
      %770 = vst [vmem:[%s172 + $0x260] sm:$0xff] %v666
      %771 = vst [vmem:[%s172 + $0x268] sm:$0xff] %v667
      %772 = vst [vmem:[%s172 + $0x270] sm:$0xff] %v668
      %773 = vst [vmem:[%s172 + $0x278] sm:$0xff] %v669
      %774 = vst [vmem:[%s172 + $0x280] sm:$0xff] %v670
      %775 = vst [vmem:[%s172 + $0x288] sm:$0xff] %v671
      %776 = vst [vmem:[%s172 + $0x290] sm:$0xff] %v672
      %777 = vst [vmem:[%s172 + $0x298] sm:$0xff] %v673
      %778 = vst [vmem:[%s172 + $0x2a0] sm:$0xff] %v674
      %779 = vst [vmem:[%s172 + $0x2a8] sm:$0xff] %v675
      %780 = vst [vmem:[%s172 + $0x2b0] sm:$0xff] %v676
      %781 = vst [vmem:[%s172 + $0x2b8] sm:$0xff] %v677
      %782 = vst [vmem:[%s172 + $0x2c0] sm:$0xff] %v678
      %783 = vst [vmem:[%s172 + $0x2c8] sm:$0xff] %v679
      %784 = vst [vmem:[%s172 + $0x2d0] sm:$0xff] %v680
      %785 = vst [vmem:[%s172 + $0x2d8] sm:$0xff] %v681
      %786 = vst [vmem:[%s172 + $0x2e0] sm:$0xff] %v682
      %787 = vst [vmem:[%s172 + $0x2e8] sm:$0xff] %v683
      %788 = vst [vmem:[%s172 + $0x2f0] sm:$0xff] %v684
      %789 = vst [vmem:[%s172 + $0x2f8] sm:$0xff] %v685
      %790 = vst [vmem:[%s172 + $0x300] sm:$0xff] %v686
      %791 = vst [vmem:[%s172 + $0x308] sm:$0xff] %v687
      %792 = vst [vmem:[%s172 + $0x310] sm:$0xff] %v688
      %793 = vst [vmem:[%s172 + $0x318] sm:$0xff] %v689
      %794 = vst [vmem:[%s172 + $0x320] sm:$0xff] %v690
      %795 = vst [vmem:[%s172 + $0x328] sm:$0xff] %v691
      %796 = vst [vmem:[%s172 + $0x330] sm:$0xff] %v692
      %797 = vst [vmem:[%s172 + $0x338] sm:$0xff] %v693
      %s798 = smul.u32 104, %s14
      %p799 = scmp.lt.s32.totalorder %s798, 207
      %s800 = scalar_select %p799, %s798, 207
      %s801 = smul.addr %s800, 8
      %s802 = scalar_lea.vmem %s3, %s801
      // Predicated region
      $region33: #{_normalize_aligned.1} parent=31 // pred_check
        %p803 = pneg %p100
      $region34: #{_normalize_aligned.1} parent=31 // pred_check_branch
        %805 = sbr.rel (%p803) target = $region36
      $region35: #{_normalize_aligned.1} parent=31 // pred_region
        %s806 = smul.u32 104, %s14
      $region36: #{_normalize_aligned.1} parent=31 // pred_fallthru
        _
    $region32: #{_normalize_aligned.1} parent=5 // pred_fallthru
      _
    %p807 = scmp.le.s32.totalorder 2, %s9
    // Predicated region
    $region37: #{_normalize_aligned.1} parent=5 // pred_check
      %p808 = pneg %p807
    $region38: #{_normalize_aligned.1} parent=5 // pred_check_branch
      %810 = sbr.rel (%p808) target = $region40
    $region39: #{_normalize_aligned.1} parent=5 // pred_region
      %s811 = ssub.s32 %s9, 2
      // Predicated region
      $region41: #{_normalize_aligned.1} parent=39 // pred_check
        %p812 = pneg %p106
      $region42: #{_normalize_aligned.1} parent=39 // pred_check_branch
        %814 = sbr.rel (%p812) target = $region44
      $region43: #{_normalize_aligned.1} parent=39 // pred_region
        %s815 = smul.u32 104, %s15
        %p816 = scmp.lt.s32.totalorder %s815, 207
        %s817 = scalar_select %p816, %s815, 207
        %s818 = smul.addr %s817, 8
        %s819 = scalar_lea.vmem %s3, %s818
      $region44: #{_normalize_aligned.1} parent=39 // pred_fallthru
        _
    $region40: #{_normalize_aligned.1} parent=5 // pred_fallthru
      _
  $region6: #{_normalize_aligned.1} parent=0 // loop_footer
    %s13 = sadd.s32 1, %s9
  $region7: #{_normalize_aligned.1} parent=0 // loop_footer_branch
    %8 = sbr.rel target = $region3
  $region8: #{_normalize_aligned.1} parent=0 // loop_exit
    _

</llo_original>
